<compile_context>
chip_gen: v7x
topology: tpu7x:2x2x1
jax: 0.10.0
libtpu: 0.0.40
codegen_flags: <defaults>
</compile_context>

<pallas_src>
import functools
import math

import jax
import jax.numpy as jnp
from jax.experimental import pallas as pl
from jax.experimental.pallas import tpu as pltpu

_LANES = 128


def _round_up(a, b):
    return (a + b - 1) // b * b


def gumbel_softmax_kernel(x_ref, u_ref, o_ref, *, inv_tau, hard):
    x = x_ref[...].astype(jnp.float32)
    # u in [0, 1); clamp away exact 0 so log / mul-by-inf stay well-defined.
    u = jnp.maximum(u_ref[...], 1e-30)

    if hard:
        # z > 0  <=>  2x + log(u) - log(1-u) > 0  <=>  u * (1 + exp(2x)) > 1
        # (tau > 0 drops out of the sign test).  One EUP op per element.
        ex = jnp.exp(2.0 * x)
        out = jnp.where(u * (1.0 + ex) > 1.0, 1.0, 0.0)
    else:
        # Difference of two iid Gumbel(0,1) draws is Logistic(0,1):
        #   g0 - g1 = log(u) - log(1 - u)
        noise = jnp.log(u) - jnp.log(1.0 - u)
        z = (2.0 * x + noise) * inv_tau
        # y_soft = softmax([ (x+g0)/tau, (-x+g1)/tau ])[0] = sigmoid(z)
        out = 1.0 / (1.0 + jnp.exp(-z))

    o_ref[...] = out.astype(o_ref.dtype)


def gumbel_softmax(logits, key, *, tau=1.0, hard=True):
    """Pallas TPU implementation of GumbelSoftmax.forward (forward pass only)."""
    orig_shape = logits.shape
    orig_dtype = logits.dtype
    total = int(math.prod(orig_shape)) if len(orig_shape) else 1

    # Lane-dense slab: flatten to (rows, 128), pad the tail.
    rows = -(-total // _LANES)
    if rows <= 1024:
        tm = _round_up(max(rows, 1), 8)     # single tile, 8-sublane aligned
    else:
        tm = 1024                           # 1024*128*4B = 512 KiB per f32 tile
    rows_pad = _round_up(rows, tm)
    padded = rows_pad * _LANES

    flat = logits.reshape(-1)
    if padded != total:
        flat = jnp.pad(flat, (0, padded - total))
    x2 = flat.reshape(rows_pad, _LANES)

    # One uniform per element (logistic noise / threshold is formed in-kernel).
    u2 = jax.random.uniform(key, (rows_pad, _LANES), dtype=jnp.float32)

    kernel = functools.partial(
        gumbel_softmax_kernel, inv_tau=float(1.0 / tau), hard=bool(hard))

    grid = (rows_pad // tm,)
    out2 = pl.pallas_call(
        kernel,
        out_shape=jax.ShapeDtypeStruct((rows_pad, _LANES), orig_dtype),
        grid=grid,
        in_specs=[
            pl.BlockSpec((tm, _LANES), lambda i: (i, 0)),
            pl.BlockSpec((tm, _LANES), lambda i: (i, 0)),
        ],
        out_specs=pl.BlockSpec((tm, _LANES), lambda i: (i, 0)),
        compiler_params=pltpu.CompilerParams(
            dimension_semantics=("parallel",),   # elementwise: shard across TCs
            vmem_limit_bytes=32 * 1024 * 1024,
        ),
    )(x2, u2)

    return out2.reshape(-1)[:total].reshape(orig_shape)


if __name__ == "__main__":
    key = jax.random.PRNGKey(0)
    k_logits, k_noise = jax.random.split(key)

    # Small NCHW-like logits, consistent with a conv-feature-map input.
    logits = jax.random.normal(k_logits, (2, 4, 16, 16), dtype=jnp.float32)

    # hard=True path (module default): output must be exactly 0/1.
    out_hard = gumbel_softmax(logits, k_noise, tau=1.0, hard=True)
    out_hard = jax.block_until_ready(out_hard)
    assert out_hard.shape == logits.shape
    assert out_hard.dtype == logits.dtype
    assert bool(jnp.all((out_hard == 0.0) | (out_hard == 1.0)))

    # soft path sanity check: valid probabilities.
    out_soft = gumbel_softmax(logits, k_noise, tau=1.0, hard=False)
    out_soft = jax.block_until_ready(out_soft)
    assert out_soft.shape == logits.shape
    assert bool(jnp.all((out_soft >= 0.0) & (out_soft <= 1.0)))

    # Consistency: hard decision agrees with thresholding the soft value at 0.5
    # (same uniforms feed both paths).
    agree = jnp.mean((out_soft > 0.5).astype(jnp.float32) == out_hard)
    assert bool(agree == 1.0)

    print("KERNEL_OK")
</pallas_src>

<mosaic_0001>
module attributes {stable_mosaic.version = 11 : i64} {
  func.func @gumbel_softmax_kernel(%arg0: i32, %arg1: memref<16x128xf32, #tpu.memory_space<vmem>>, %arg2: memref<16x128xf32, #tpu.memory_space<vmem>>, %arg3: memref<16x128xf32, #tpu.memory_space<vmem>>) attributes {dimension_semantics = [#tpu.dimension_semantics<parallel>], iteration_bounds = array<i64: 1>, scalar_prefetch = 0 : i64, scratch_operands = 0 : i64, tpu.core_type = #tpu.core_type<tc>, window_params = [{transform_indices = @transform_0, window_bounds = array<i64: 16, 128>}, {transform_indices = @transform_1, window_bounds = array<i64: 16, 128>}, {transform_indices = @transform_2, window_bounds = array<i64: 16, 128>}]} {
    %c0 = arith.constant 0 : index
    %c0_0 = arith.constant 0 : index
    %0 = vector.load %arg1[%c0, %c0_0] : memref<16x128xf32, #tpu.memory_space<vmem>>, vector<16x128xf32>
    %c0_1 = arith.constant 0 : index
    %c0_2 = arith.constant 0 : index
    %1 = vector.load %arg2[%c0_1, %c0_2] : memref<16x128xf32, #tpu.memory_space<vmem>>, vector<16x128xf32>
    %cst = arith.constant 1.000000e-30 : f32
    %2 = vector.broadcast %cst : f32 to vector<16x128xf32>
    %3 = arith.maximumf %1, %2 : vector<16x128xf32>
    %cst_3 = arith.constant 2.000000e+00 : f32
    %4 = vector.broadcast %cst_3 : f32 to vector<16x128xf32>
    %5 = arith.mulf %4, %0 : vector<16x128xf32>
    %6 = math.exp %5 : vector<16x128xf32>
    %cst_4 = arith.constant 1.000000e+00 : f32
    %7 = vector.broadcast %cst_4 : f32 to vector<16x128xf32>
    %8 = arith.addf %7, %6 : vector<16x128xf32>
    %9 = arith.mulf %3, %8 : vector<16x128xf32>
    %cst_5 = arith.constant 1.000000e+00 : f32
    %10 = vector.broadcast %cst_5 : f32 to vector<16x128xf32>
    %11 = arith.cmpf ogt, %9, %10 : vector<16x128xf32>
    %cst_6 = arith.constant 1.000000e+00 : f32
    %cst_7 = arith.constant 0.000000e+00 : f32
    %12 = vector.broadcast %cst_6 : f32 to vector<16x128xf32>
    %13 = vector.broadcast %cst_7 : f32 to vector<16x128xf32>
    %14 = arith.select %11, %12, %13 : vector<16x128xi1>, vector<16x128xf32>
    %c0_8 = arith.constant 0 : index
    %c0_9 = arith.constant 0 : index
    %15 = vector.load %arg3[%c0_8, %c0_9] : memref<16x128xf32, #tpu.memory_space<vmem>>, vector<16x128xf32>
    tpu.vector_store %arg3[%c0_8, %c0_9], %14 {strides = array<i32>} : memref<16x128xf32, #tpu.memory_space<vmem>>, vector<16x128xf32>,
    return
  }
  func.func @transform_0(%arg0: i32) -> (i32, i32) {
    %c0_i32 = arith.constant 0 : i32
    %c0_i32_0 = arith.constant 0 : i32
    return %arg0, %c0_i32 : i32, i32
  }
  func.func @transform_1(%arg0: i32) -> (i32, i32) {
    %c0_i32 = arith.constant 0 : i32
    %c0_i32_0 = arith.constant 0 : i32
    return %arg0, %c0_i32 : i32, i32
  }
  func.func @transform_2(%arg0: i32) -> (i32, i32) {
    %c0_i32 = arith.constant 0 : i32
    %c0_i32_0 = arith.constant 0 : i32
    return %arg0, %c0_i32 : i32, i32
  }
}

</mosaic_0001>

<llo_original>
// kernel: tpu_custom_call.1
$region0: #{tpu_custom_call.1}
  #allocation0 [shape = 'u32[]', space=smem, size = 0x4, offset = 0x4, fixed_abs, tag = 'smem constant byte address 0x4 - core index']
  #allocation1 [shape = 'u32[144,128]{1,0:T(1,128)}', space=vmem, size = 0x12000, scoped, tag = 'internal scratch']
  %s0 = inlined_call_operand.hbm [shape: f32[16,128], index: 0, kind: input, shape index: {}]
  %s1 = inlined_call_operand.hbm [shape: f32[16,128], index: 1, kind: input, shape index: {}]
  %s2 = inlined_call_operand.hbm [shape: f32[16,128], index: 2, kind: output, shape index: {}]
  %s3 = sld [smem:[#allocation0]]
  $region26: #{tpu_custom_call.1} parent=0
    _
  %s5 = ssub.s32 1, %s3
  %s6 = scalar_select 0, %s5, %s3
  $region1: #{tpu_custom_call.1} parent=0
    #allocation2 [shape = 'u8[8192]{0}', space=vmem, size = 0x2000, scoped, tag = 'input window, operand 0, single buffered']
    #allocation3 [shape = 's32[1]{0}', space=sflag, size = 0x4, scoped, tag = 'scoped memory for tpu_custom_call.1']
    #allocation4 [shape = 's32[1]{0}', space=sflag, size = 0x4, scoped, tag = 'scoped memory for tpu_custom_call.1']
    #allocation5 [shape = 'u8[8192]{0}', space=vmem, size = 0x2000, scoped, tag = 'input window, operand 1, single buffered']
    #allocation6 [shape = 's32[1]{0}', space=sflag, size = 0x4, scoped, tag = 'scoped memory for tpu_custom_call.1']
    #allocation7 [shape = 'u8[8192]{0}', space=vmem, size = 0x2000, scoped, tag = 'output window, operand 0, single buffered']
    %7 = vsyncpa [#allocation3], 0
    %8 = vsyncpa [#allocation6], 0
    %9 = vsyncpa [#allocation4], 0
    // Predicated region
    $region2: #{tpu_custom_call.1} parent=1 // pred_check
      _
    $region3: #{tpu_custom_call.1} parent=1 // pred_check_branch
      %11 = sbr.rel (0) target = $region5
    $region4: #{tpu_custom_call.1} parent=1 // pred_region
      %s13 = ssub.s32 256, 256
      %14 = vsyncadd [#allocation3], %s13
      %s15 = sshll.u32 [#allocation2], 4
      %s16 = int_to_ptr.vmem [resolvable:$true] %s15
      %21 = dma.hbm_to_vmem [thread:$0]  %s0, 256, %s16, [#allocation3], 128, 128, 8
    $region5: #{tpu_custom_call.1} parent=1 // pred_fallthru
      _
    // Predicated region
    $region6: #{tpu_custom_call.1} parent=1 // pred_check
      _
    $region7: #{tpu_custom_call.1} parent=1 // pred_check_branch
      %23 = sbr.rel (0) target = $region9
    $region8: #{tpu_custom_call.1} parent=1 // pred_region
      %s25 = ssub.s32 256, 256
      %26 = vsyncadd [#allocation6], %s25
      %s27 = sshll.u32 [#allocation5], 4
      %s28 = int_to_ptr.vmem [resolvable:$true] %s27
      %33 = dma.hbm_to_vmem [thread:$0]  %s1, 256, %s28, [#allocation6], 128, 128, 8
    $region9: #{tpu_custom_call.1} parent=1 // pred_fallthru
      _
    // Predicated region
    $region10: #{tpu_custom_call.1} parent=1 // pred_check
      _
    $region11: #{tpu_custom_call.1} parent=1 // pred_check_branch
      %35 = sbr.rel (0) target = $region13
    $region12: #{tpu_custom_call.1} parent=1 // pred_region
      %36 = dma.done [#allocation3], 256
    $region13: #{tpu_custom_call.1} parent=1 // pred_fallthru
      _
    // Predicated region
    $region14: #{tpu_custom_call.1} parent=1 // pred_check
      _
    $region15: #{tpu_custom_call.1} parent=1 // pred_check_branch
      %38 = sbr.rel (0) target = $region17
    $region16: #{tpu_custom_call.1} parent=1 // pred_region
      %39 = dma.done [#allocation6], 256
    $region17: #{tpu_custom_call.1} parent=1 // pred_fallthru
      _
    %v40 = vld [vmem:[#allocation2] sm:$0xff]
    %v41 = vld [vmem:[#allocation2 + $0x8] sm:$0xff]
    %v42 = vld [vmem:[#allocation5] sm:$0xff]
    %v43 = vld [vmem:[#allocation5 + $0x8] sm:$0xff]
    %v44 = vmax.f32 %v42, 1e-30
    %v45 = vmax.f32 %v43, 1e-30
    %v46 = vmul.f32 %v40, 2.0
    %v47 = vmul.f32 %v41, 2.0
    %v48 = vmul.f32 %v46, 1.442695
    %v49 = vpow.pop %v48
    %v50 = vmul.f32 %v47, 1.442695
    %v51 = vpow.pop %v50
    %v52 = vadd.f32 %v49, 1.0
    %v53 = vadd.f32 %v51, 1.0
    %v54 = vmul.f32 %v44, %v52
    %v55 = vmul.f32 %v45, %v53
    %vm56 = vcmp.gt.f32.partialorder %v54, 1.0
    %vm57 = vcmp.gt.f32.partialorder %v55, 1.0
    %v58 = vsel %vm56, 1.0, 0.0
    %v59 = vsel %vm57, 1.0, 0.0
    %60 = vst [vmem:[#allocation7] sm:$0xff] %v58
    %61 = vst [vmem:[#allocation7 + $0x8] sm:$0xff] %v59
    // Predicated region
    $region18: #{tpu_custom_call.1} parent=1 // pred_check
      _
    $region19: #{tpu_custom_call.1} parent=1 // pred_check_branch
      %63 = sbr.rel (0) target = $region21
    $region20: #{tpu_custom_call.1} parent=1 // pred_region
      %s65 = ssub.s32 256, 256
      %66 = vsyncadd [#allocation4], %s65
      %s67 = sshll.u32 [#allocation7], 4
      %s68 = int_to_ptr.vmem [resolvable:$true] %s67
      %73 = dma.vmem_to_hbm [thread:$0]  %s68, 256, %s2, [#allocation4], 128, 128, 8
    $region21: #{tpu_custom_call.1} parent=1 // pred_fallthru
      _
    // Predicated region
    $region22: #{tpu_custom_call.1} parent=1 // pred_check
      _
    $region23: #{tpu_custom_call.1} parent=1 // pred_check_branch
      %75 = sbr.rel (0) target = $region25
    $region24: #{tpu_custom_call.1} parent=1 // pred_region
      %76 = dma.done [#allocation4], 256
    $region25: #{tpu_custom_call.1} parent=1 // pred_fallthru
      _
    %77 = vsyncpa [#allocation3], 1
    %78 = vsyncpa [#allocation6], 1
    %79 = vsyncpa [#allocation4], 1

</llo_original>
